<compile_context>
chip_gen: v6e
topology: v6e:2x2x1
jax: 0.10.0
libtpu: 0.0.40
codegen_flags: <defaults>
</compile_context>

<pallas_src>
import functools

import jax
import jax.numpy as jnp
import numpy as np
from jax import lax
from jax.experimental import pallas as pl
from jax.experimental.pallas import tpu as pltpu

K = 5     # kernel size
PAD = 2   # padding (= K // 2)


def basic_block_kernel(x_ref, w1_ref, b1_ref, w2_ref, b2_ref, o_ref, *, seq_len):
    # x_ref : (C, M)    f32, M = N*L; column j holds sample j//L, position j%L
    # w1_ref: (C, K*C)  bf16, W_flat[co, k*C + ci] = W1[co, ci, k]
    # b1_ref: (C, 1)    f32
    # w2_ref: (C, K*C)  bf16
    # b2_ref: (C, 1)    f32
    # o_ref : (C, M)    f32
    C, M = x_ref.shape
    L = seq_len

    x = x_ref[...]                                               # (C, M) f32

    # Position of each column inside its own sample (0 .. L-1).
    l_idx = lax.broadcasted_iota(jnp.int32, (C, M), 1) % L

    def conv(inp, w_ref, b_ref):
        # im2col operand: K lane-rolled, edge-masked copies stacked along the
        # contraction (sublane) axis -> single deep matmul on the MXU.
        taps = []
        for k in range(K):                                       # static unroll
            d = k - PAD                                          # tap offset
            if d == 0:
                taps.append(inp)
            else:
                # rolled[:, j] == inp[:, (j + d) mod M]  (jnp.roll convention)
                rolled = pltpu.roll(inp, (-d) % M, 1)
                valid = jnp.logical_and(l_idx + d >= 0, l_idx + d < L)
                taps.append(jnp.where(valid, rolled, 0.0))
        x_col = jnp.concatenate(taps, axis=0)                    # (K*C, M) f32
        acc = jnp.dot(w_ref[...], x_col.astype(jnp.bfloat16),
                      preferred_element_type=jnp.float32)        # (C, M) f32
        return acc + b_ref[...]                                  # bias: lane bcast

    h = jnp.maximum(conv(x, w1_ref, b1_ref), 0.0)                # relu(conv1(x))
    y = conv(h, w2_ref, b2_ref) + x                              # conv2 + identity
    o_ref[...] = jnp.maximum(y, 0.0).astype(o_ref.dtype)         # final relu


def basic_block_forward(x_ncl, w1, b1, w2, b2):
    """x_ncl: (N, C, L) float32 (PyTorch Conv1d layout).
       w1, w2: (C_out, C_in, K) PyTorch layout.  b1, b2: (C_out,)."""
    N, C, L = x_ncl.shape
    M = N * L

    # (N, C, L) -> (C, N*L): put the batch*length axis on lanes (lane-dense IO).
    x_cm = jnp.transpose(x_ncl, (1, 0, 2)).reshape(C, M).astype(jnp.float32)

    # (C_out, C_in, K) -> (C_out, K*C_in), tap-major; bf16 halves weight DMA.
    w1f = jnp.transpose(w1, (0, 2, 1)).reshape(C, K * C).astype(jnp.bfloat16)
    w2f = jnp.transpose(w2, (0, 2, 1)).reshape(C, K * C).astype(jnp.bfloat16)
    b1c = b1.reshape(C, 1).astype(jnp.float32)
    b2c = b2.reshape(C, 1).astype(jnp.float32)

    kernel = functools.partial(basic_block_kernel, seq_len=L)

    out_cm = pl.pallas_call(
        kernel,
        out_shape=jax.ShapeDtypeStruct((C, M), x_ncl.dtype),
        grid_spec=pltpu.PrefetchScalarGridSpec(
            num_scalar_prefetch=0,
            grid=(1,),   # whole problem in one step: no per-sample pipeline overhead
            in_specs=[
                pl.BlockSpec((C, M), lambda i: (0, 0)),
                pl.BlockSpec((C, K * C), lambda i: (0, 0)),
                pl.BlockSpec((C, 1), lambda i: (0, 0)),
                pl.BlockSpec((C, K * C), lambda i: (0, 0)),
                pl.BlockSpec((C, 1), lambda i: (0, 0)),
            ],
            out_specs=pl.BlockSpec((C, M), lambda i: (0, 0)),
        ),
        compiler_params=pltpu.CompilerParams(
            dimension_semantics=("arbitrary",)),
    )(x_cm, w1f, b1c, w2f, b2c)

    # (C, N*L) -> (N, C, L) back to PyTorch layout.
    return jnp.transpose(out_cm.reshape(C, N, L), (1, 0, 2))


def _reference_forward(x_ncl, w1, b1, w2, b2):
    """Pure-JAX f32 reference matching nn.Conv1d semantics (NCL, OIW weights)."""
    dn = lax.conv_dimension_numbers(x_ncl.shape, w1.shape, ("NCH", "OIH", "NCH"))
    out = lax.conv_general_dilated(x_ncl, w1, window_strides=(1,),
                                   padding=[(PAD, PAD)], dimension_numbers=dn)
    out = out + b1[None, :, None]
    out = jnp.maximum(out, 0.0)
    out = lax.conv_general_dilated(out, w2, window_strides=(1,),
                                   padding=[(PAD, PAD)], dimension_numbers=dn)
    out = out + b2[None, :, None]
    out = jnp.maximum(out + x_ncl, 0.0)
    return out


if __name__ == "__main__":
    # Small shapes consistent with the module (stride=1, downsample=None -> C_in == C_out).
    N, C, L = 2, 32, 64

    key = jax.random.PRNGKey(0)
    k_x, k_w1, k_b1, k_w2, k_b2 = jax.random.split(key, 5)

    x = jax.random.normal(k_x, (N, C, L), dtype=jnp.float32)
    # Deterministic synthetic parameters (shapes per nn.Conv1d(C, C, kernel_size=5)).
    fan_in = C * K
    bound = 1.0 / np.sqrt(fan_in)
    w1 = jax.random.uniform(k_w1, (C, C, K), jnp.float32, -bound, bound)
    b1 = jax.random.uniform(k_b1, (C,), jnp.float32, -bound, bound)
    w2 = jax.random.uniform(k_w2, (C, C, K), jnp.float32, -bound, bound)
    b2 = jax.random.uniform(k_b2, (C,), jnp.float32, -bound, bound)

    out = basic_block_forward(x, w1, b1, w2, b2)
    out = jax.block_until_ready(out)

    ref = jax.block_until_ready(_reference_forward(x, w1, b1, w2, b2))
    # Tolerance loosened vs. the pure-f32 version: matmul operands are bf16
    # (accumulation stays f32).
    np.testing.assert_allclose(np.asarray(out), np.asarray(ref),
                               rtol=2e-2, atol=2e-2)

    print("KERNEL_OK")
</pallas_src>

<mosaic_0001>
module attributes {stable_mosaic.version = 11 : i64} {
  func.func @basic_block_kernel(%arg0: i32, %arg1: memref<32x128xf32, #tpu.memory_space<vmem>>, %arg2: memref<32x160xbf16, #tpu.memory_space<vmem>>, %arg3: memref<32x1xf32, #tpu.memory_space<vmem>>, %arg4: memref<32x160xbf16, #tpu.memory_space<vmem>>, %arg5: memref<32x1xf32, #tpu.memory_space<vmem>>, %arg6: memref<32x128xf32, #tpu.memory_space<vmem>>) attributes {dimension_semantics = [#tpu.dimension_semantics<arbitrary>], iteration_bounds = array<i64: 1>, scalar_prefetch = 0 : i64, scratch_operands = 0 : i64, tpu.core_type = #tpu.core_type<tc>, window_params = [{pipeline_mode = #tpu.pipeline_mode<synchronous>, transform_indices = @transform_0, window_bounds = array<i64: 32, 128>}, {pipeline_mode = #tpu.pipeline_mode<synchronous>, transform_indices = @transform_1, window_bounds = array<i64: 32, 160>}, {pipeline_mode = #tpu.pipeline_mode<synchronous>, transform_indices = @transform_2, window_bounds = array<i64: 32, 1>}, {pipeline_mode = #tpu.pipeline_mode<synchronous>, transform_indices = @transform_3, window_bounds = array<i64: 32, 160>}, {pipeline_mode = #tpu.pipeline_mode<synchronous>, transform_indices = @transform_4, window_bounds = array<i64: 32, 1>}, {pipeline_mode = #tpu.pipeline_mode<synchronous>, transform_indices = @transform_5, window_bounds = array<i64: 32, 128>}]} {
    %c0 = arith.constant 0 : index
    %c0_0 = arith.constant 0 : index
    %0 = vector.load %arg1[%c0, %c0_0] : memref<32x128xf32, #tpu.memory_space<vmem>>, vector<32x128xf32>
    %1 = tpu.iota {dimensions = array<i32: 1>} : vector<32x128xi32>
    %c64_i32 = arith.constant 64 : i32
    %c0_i32 = arith.constant 0 : i32
    %2 = arith.cmpi eq, %c64_i32, %c0_i32 : i32
    %c1_i32 = arith.constant 1 : i32
    %3 = arith.select %2, %c1_i32, %c64_i32 : i32
    %4 = vector.broadcast %3 : i32 to vector<32x128xi32>
    %5 = arith.remsi %1, %4 : vector<32x128xi32>
    %c0_i32_1 = arith.constant 0 : i32
    %6 = vector.broadcast %c0_i32_1 : i32 to vector<32x128xi32>
    %7 = arith.cmpi ne, %5, %6 : vector<32x128xi32>
    %c0_i32_2 = arith.constant 0 : i32
    %8 = vector.broadcast %c0_i32_2 : i32 to vector<32x128xi32>
    %9 = arith.cmpi slt, %5, %8 : vector<32x128xi32>
    %c0_i32_3 = arith.constant 0 : i32
    %10 = arith.cmpi slt, %3, %c0_i32_3 : i32
    %11 = vector.broadcast %10 : i1 to vector<32x128xi1>
    %12 = vector.broadcast %11 : vector<32x128xi1> to vector<32x128xi1>
    %13 = arith.xori %9, %12 : vector<32x128xi1>
    %14 = arith.andi %13, %7 : vector<32x128xi1>
    %15 = vector.broadcast %3 : i32 to vector<32x128xi32>
    %16 = arith.addi %5, %15 : vector<32x128xi32>
    %17 = arith.select %14, %16, %5 : vector<32x128xi1>, vector<32x128xi32>
    %c2_i32 = arith.constant 2 : i32
    %18 = tpu.dynamic_rotate %0 by %c2_i32 dim 1 : vector<32x128xf32>, i32 -> vector<32x128xf32>
    %c-2_i32 = arith.constant -2 : i32
    %19 = vector.broadcast %c-2_i32 : i32 to vector<32x128xi32>
    %20 = arith.addi %17, %19 : vector<32x128xi32>
    %c0_i32_4 = arith.constant 0 : i32
    %21 = vector.broadcast %c0_i32_4 : i32 to vector<32x128xi32>
    %22 = arith.cmpi sge, %20, %21 : vector<32x128xi32>
    %c-2_i32_5 = arith.constant -2 : i32
    %23 = vector.broadcast %c-2_i32_5 : i32 to vector<32x128xi32>
    %24 = arith.addi %17, %23 : vector<32x128xi32>
    %c64_i32_6 = arith.constant 64 : i32
    %25 = vector.broadcast %c64_i32_6 : i32 to vector<32x128xi32>
    %26 = arith.cmpi slt, %24, %25 : vector<32x128xi32>
    %27 = arith.andi %22, %26 : vector<32x128xi1>
    %cst = arith.constant 0.000000e+00 : f32
    %28 = vector.broadcast %cst : f32 to vector<32x128xf32>
    %29 = arith.select %27, %18, %28 : vector<32x128xi1>, vector<32x128xf32>
    %c1_i32_7 = arith.constant 1 : i32
    %30 = tpu.dynamic_rotate %0 by %c1_i32_7 dim 1 : vector<32x128xf32>, i32 -> vector<32x128xf32>
    %c-1_i32 = arith.constant -1 : i32
    %31 = vector.broadcast %c-1_i32 : i32 to vector<32x128xi32>
    %32 = arith.addi %17, %31 : vector<32x128xi32>
    %c0_i32_8 = arith.constant 0 : i32
    %33 = vector.broadcast %c0_i32_8 : i32 to vector<32x128xi32>
    %34 = arith.cmpi sge, %32, %33 : vector<32x128xi32>
    %c-1_i32_9 = arith.constant -1 : i32
    %35 = vector.broadcast %c-1_i32_9 : i32 to vector<32x128xi32>
    %36 = arith.addi %17, %35 : vector<32x128xi32>
    %c64_i32_10 = arith.constant 64 : i32
    %37 = vector.broadcast %c64_i32_10 : i32 to vector<32x128xi32>
    %38 = arith.cmpi slt, %36, %37 : vector<32x128xi32>
    %39 = arith.andi %34, %38 : vector<32x128xi1>
    %cst_11 = arith.constant 0.000000e+00 : f32
    %40 = vector.broadcast %cst_11 : f32 to vector<32x128xf32>
    %41 = arith.select %39, %30, %40 : vector<32x128xi1>, vector<32x128xf32>
    %c127_i32 = arith.constant 127 : i32
    %42 = tpu.dynamic_rotate %0 by %c127_i32 dim 1 : vector<32x128xf32>, i32 -> vector<32x128xf32>
    %c1_i32_12 = arith.constant 1 : i32
    %43 = vector.broadcast %c1_i32_12 : i32 to vector<32x128xi32>
    %44 = arith.addi %17, %43 : vector<32x128xi32>
    %c0_i32_13 = arith.constant 0 : i32
    %45 = vector.broadcast %c0_i32_13 : i32 to vector<32x128xi32>
    %46 = arith.cmpi sge, %44, %45 : vector<32x128xi32>
    %c1_i32_14 = arith.constant 1 : i32
    %47 = vector.broadcast %c1_i32_14 : i32 to vector<32x128xi32>
    %48 = arith.addi %17, %47 : vector<32x128xi32>
    %c64_i32_15 = arith.constant 64 : i32
    %49 = vector.broadcast %c64_i32_15 : i32 to vector<32x128xi32>
    %50 = arith.cmpi slt, %48, %49 : vector<32x128xi32>
    %51 = arith.andi %46, %50 : vector<32x128xi1>
    %cst_16 = arith.constant 0.000000e+00 : f32
    %52 = vector.broadcast %cst_16 : f32 to vector<32x128xf32>
    %53 = arith.select %51, %42, %52 : vector<32x128xi1>, vector<32x128xf32>
    %c126_i32 = arith.constant 126 : i32
    %54 = tpu.dynamic_rotate %0 by %c126_i32 dim 1 : vector<32x128xf32>, i32 -> vector<32x128xf32>
    %c2_i32_17 = arith.constant 2 : i32
    %55 = vector.broadcast %c2_i32_17 : i32 to vector<32x128xi32>
    %56 = arith.addi %17, %55 : vector<32x128xi32>
    %c0_i32_18 = arith.constant 0 : i32
    %57 = vector.broadcast %c0_i32_18 : i32 to vector<32x128xi32>
    %58 = arith.cmpi sge, %56, %57 : vector<32x128xi32>
    %c2_i32_19 = arith.constant 2 : i32
    %59 = vector.broadcast %c2_i32_19 : i32 to vector<32x128xi32>
    %60 = arith.addi %17, %59 : vector<32x128xi32>
    %c64_i32_20 = arith.constant 64 : i32
    %61 = vector.broadcast %c64_i32_20 : i32 to vector<32x128xi32>
    %62 = arith.cmpi slt, %60, %61 : vector<32x128xi32>
    %63 = arith.andi %58, %62 : vector<32x128xi1>
    %cst_21 = arith.constant 0.000000e+00 : f32
    %64 = vector.broadcast %cst_21 : f32 to vector<32x128xf32>
    %65 = arith.select %63, %54, %64 : vector<32x128xi1>, vector<32x128xf32>
    %66 = tpu.concatenate %29, %41, %0, %53, %65 in 0 : vector<32x128xf32>, vector<32x128xf32>, vector<32x128xf32>, vector<32x128xf32>, vector<32x128xf32> -> vector<160x128xf32>
    %c0_22 = arith.constant 0 : index
    %c0_23 = arith.constant 0 : index
    %67 = vector.load %arg2[%c0_22, %c0_23] : memref<32x160xbf16, #tpu.memory_space<vmem>>, vector<32x160xbf16>
    %68 = arith.truncf %66 : vector<160x128xf32> to vector<160x128xbf16>
    %cst_24 = arith.constant dense<0.000000e+00> : vector<32x128xf32>
    %69 = tpu.matmul %67, %68, %cst_24 {dimension_numbers = #tpu.dot_dimension_numbers<[1], [0], [0], [1], [0, 0, 1, 1], [], []>} : vector<32x160xbf16>, vector<160x128xbf16>, vector<32x128xf32> -> vector<32x128xf32>
    %c0_25 = arith.constant 0 : index
    %c0_26 = arith.constant 0 : index
    %70 = vector.load %arg3[%c0_25, %c0_26] : memref<32x1xf32, #tpu.memory_space<vmem>>, vector<32x1xf32>
    %71 = vector.broadcast %70 : vector<32x1xf32> to vector<32x128xf32>
    %72 = arith.addf %69, %71 : vector<32x128xf32>
    %cst_27 = arith.constant 0.000000e+00 : f32
    %73 = vector.broadcast %cst_27 : f32 to vector<32x128xf32>
    %74 = arith.maximumf %72, %73 : vector<32x128xf32>
    %c2_i32_28 = arith.constant 2 : i32
    %75 = tpu.dynamic_rotate %74 by %c2_i32_28 dim 1 : vector<32x128xf32>, i32 -> vector<32x128xf32>
    %c-2_i32_29 = arith.constant -2 : i32
    %76 = vector.broadcast %c-2_i32_29 : i32 to vector<32x128xi32>
    %77 = arith.addi %17, %76 : vector<32x128xi32>
    %c0_i32_30 = arith.constant 0 : i32
    %78 = vector.broadcast %c0_i32_30 : i32 to vector<32x128xi32>
    %79 = arith.cmpi sge, %77, %78 : vector<32x128xi32>
    %c-2_i32_31 = arith.constant -2 : i32
    %80 = vector.broadcast %c-2_i32_31 : i32 to vector<32x128xi32>
    %81 = arith.addi %17, %80 : vector<32x128xi32>
    %c64_i32_32 = arith.constant 64 : i32
    %82 = vector.broadcast %c64_i32_32 : i32 to vector<32x128xi32>
    %83 = arith.cmpi slt, %81, %82 : vector<32x128xi32>
    %84 = arith.andi %79, %83 : vector<32x128xi1>
    %cst_33 = arith.constant 0.000000e+00 : f32
    %85 = vector.broadcast %cst_33 : f32 to vector<32x128xf32>
    %86 = arith.select %84, %75, %85 : vector<32x128xi1>, vector<32x128xf32>
    %c1_i32_34 = arith.constant 1 : i32
    %87 = tpu.dynamic_rotate %74 by %c1_i32_34 dim 1 : vector<32x128xf32>, i32 -> vector<32x128xf32>
    %c-1_i32_35 = arith.constant -1 : i32
    %88 = vector.broadcast %c-1_i32_35 : i32 to vector<32x128xi32>
    %89 = arith.addi %17, %88 : vector<32x128xi32>
    %c0_i32_36 = arith.constant 0 : i32
    %90 = vector.broadcast %c0_i32_36 : i32 to vector<32x128xi32>
    %91 = arith.cmpi sge, %89, %90 : vector<32x128xi32>
    %c-1_i32_37 = arith.constant -1 : i32
    %92 = vector.broadcast %c-1_i32_37 : i32 to vector<32x128xi32>
    %93 = arith.addi %17, %92 : vector<32x128xi32>
    %c64_i32_38 = arith.constant 64 : i32
    %94 = vector.broadcast %c64_i32_38 : i32 to vector<32x128xi32>
    %95 = arith.cmpi slt, %93, %94 : vector<32x128xi32>
    %96 = arith.andi %91, %95 : vector<32x128xi1>
    %cst_39 = arith.constant 0.000000e+00 : f32
    %97 = vector.broadcast %cst_39 : f32 to vector<32x128xf32>
    %98 = arith.select %96, %87, %97 : vector<32x128xi1>, vector<32x128xf32>
    %c127_i32_40 = arith.constant 127 : i32
    %99 = tpu.dynamic_rotate %74 by %c127_i32_40 dim 1 : vector<32x128xf32>, i32 -> vector<32x128xf32>
    %c1_i32_41 = arith.constant 1 : i32
    %100 = vector.broadcast %c1_i32_41 : i32 to vector<32x128xi32>
    %101 = arith.addi %17, %100 : vector<32x128xi32>
    %c0_i32_42 = arith.constant 0 : i32
    %102 = vector.broadcast %c0_i32_42 : i32 to vector<32x128xi32>
    %103 = arith.cmpi sge, %101, %102 : vector<32x128xi32>
    %c1_i32_43 = arith.constant 1 : i32
    %104 = vector.broadcast %c1_i32_43 : i32 to vector<32x128xi32>
    %105 = arith.addi %17, %104 : vector<32x128xi32>
    %c64_i32_44 = arith.constant 64 : i32
    %106 = vector.broadcast %c64_i32_44 : i32 to vector<32x128xi32>
    %107 = arith.cmpi slt, %105, %106 : vector<32x128xi32>
    %108 = arith.andi %103, %107 : vector<32x128xi1>
    %cst_45 = arith.constant 0.000000e+00 : f32
    %109 = vector.broadcast %cst_45 : f32 to vector<32x128xf32>
    %110 = arith.select %108, %99, %109 : vector<32x128xi1>, vector<32x128xf32>
    %c126_i32_46 = arith.constant 126 : i32
    %111 = tpu.dynamic_rotate %74 by %c126_i32_46 dim 1 : vector<32x128xf32>, i32 -> vector<32x128xf32>
    %c2_i32_47 = arith.constant 2 : i32
    %112 = vector.broadcast %c2_i32_47 : i32 to vector<32x128xi32>
    %113 = arith.addi %17, %112 : vector<32x128xi32>
    %c0_i32_48 = arith.constant 0 : i32
    %114 = vector.broadcast %c0_i32_48 : i32 to vector<32x128xi32>
    %115 = arith.cmpi sge, %113, %114 : vector<32x128xi32>
    %c2_i32_49 = arith.constant 2 : i32
    %116 = vector.broadcast %c2_i32_49 : i32 to vector<32x128xi32>
    %117 = arith.addi %17, %116 : vector<32x128xi32>
    %c64_i32_50 = arith.constant 64 : i32
    %118 = vector.broadcast %c64_i32_50 : i32 to vector<32x128xi32>
    %119 = arith.cmpi slt, %117, %118 : vector<32x128xi32>
    %120 = arith.andi %115, %119 : vector<32x128xi1>
    %cst_51 = arith.constant 0.000000e+00 : f32
    %121 = vector.broadcast %cst_51 : f32 to vector<32x128xf32>
    %122 = arith.select %120, %111, %121 : vector<32x128xi1>, vector<32x128xf32>
    %123 = tpu.concatenate %86, %98, %74, %110, %122 in 0 : vector<32x128xf32>, vector<32x128xf32>, vector<32x128xf32>, vector<32x128xf32>, vector<32x128xf32> -> vector<160x128xf32>
    %c0_52 = arith.constant 0 : index
    %c0_53 = arith.constant 0 : index
    %124 = vector.load %arg4[%c0_52, %c0_53] : memref<32x160xbf16, #tpu.memory_space<vmem>>, vector<32x160xbf16>
    %125 = arith.truncf %123 : vector<160x128xf32> to vector<160x128xbf16>
    %cst_54 = arith.constant dense<0.000000e+00> : vector<32x128xf32>
    %126 = tpu.matmul %124, %125, %cst_54 {dimension_numbers = #tpu.dot_dimension_numbers<[1], [0], [0], [1], [0, 0, 1, 1], [], []>} : vector<32x160xbf16>, vector<160x128xbf16>, vector<32x128xf32> -> vector<32x128xf32>
    %c0_55 = arith.constant 0 : index
    %c0_56 = arith.constant 0 : index
    %127 = vector.load %arg5[%c0_55, %c0_56] : memref<32x1xf32, #tpu.memory_space<vmem>>, vector<32x1xf32>
    %128 = vector.broadcast %127 : vector<32x1xf32> to vector<32x128xf32>
    %129 = arith.addf %126, %128 : vector<32x128xf32>
    %130 = arith.addf %129, %0 : vector<32x128xf32>
    %cst_57 = arith.constant 0.000000e+00 : f32
    %131 = vector.broadcast %cst_57 : f32 to vector<32x128xf32>
    %132 = arith.maximumf %130, %131 : vector<32x128xf32>
    %c0_58 = arith.constant 0 : index
    %c0_59 = arith.constant 0 : index
    %133 = vector.load %arg6[%c0_58, %c0_59] : memref<32x128xf32, #tpu.memory_space<vmem>>, vector<32x128xf32>
    tpu.vector_store %arg6[%c0_58, %c0_59], %132 {strides = array<i32>} : memref<32x128xf32, #tpu.memory_space<vmem>>, vector<32x128xf32>,
    return
  }
  func.func @transform_0(%arg0: i32) -> (i32, i32) {
    %c0_i32 = arith.constant 0 : i32
    %c0_i32_0 = arith.constant 0 : i32
    %c0_i32_1 = arith.constant 0 : i32
    return %c0_i32, %c0_i32_0 : i32, i32
  }
  func.func @transform_1(%arg0: i32) -> (i32, i32) {
    %c0_i32 = arith.constant 0 : i32
    %c0_i32_0 = arith.constant 0 : i32
    %c0_i32_1 = arith.constant 0 : i32
    return %c0_i32, %c0_i32_0 : i32, i32
  }
  func.func @transform_2(%arg0: i32) -> (i32, i32) {
    %c0_i32 = arith.constant 0 : i32
    %c0_i32_0 = arith.constant 0 : i32
    %c0_i32_1 = arith.constant 0 : i32
    return %c0_i32, %c0_i32_0 : i32, i32
  }
  func.func @transform_3(%arg0: i32) -> (i32, i32) {
    %c0_i32 = arith.constant 0 : i32
    %c0_i32_0 = arith.constant 0 : i32
    %c0_i32_1 = arith.constant 0 : i32
    return %c0_i32, %c0_i32_0 : i32, i32
  }
  func.func @transform_4(%arg0: i32) -> (i32, i32) {
    %c0_i32 = arith.constant 0 : i32
    %c0_i32_0 = arith.constant 0 : i32
    %c0_i32_1 = arith.constant 0 : i32
    return %c0_i32, %c0_i32_0 : i32, i32
  }
  func.func @transform_5(%arg0: i32) -> (i32, i32) {
    %c0_i32 = arith.constant 0 : i32
    %c0_i32_0 = arith.constant 0 : i32
    %c0_i32_1 = arith.constant 0 : i32
    return %c0_i32, %c0_i32_0 : i32, i32
  }
}

</mosaic_0001>

<llo_original>
// kernel: tpu_custom_call.1
$region0: #{tpu_custom_call.1}
  #allocation0 [shape = 'u32[]', space=smem, size = 0x4, offset = 0x4, fixed_abs, tag = 'smem constant byte address 0x4 - core index']
  #allocation1 [shape = 'u32[144,128]{1,0:T(1,128)}', space=vmem, size = 0x12000, scoped, tag = 'internal scratch']
  %s0 = inlined_call_operand.vmem [shape: f32[32,128], index: 0, kind: input, shape index: {}]
  %s1 = inlined_call_operand.vmem [shape: bf16[32,160], index: 1, kind: input, shape index: {}]
  %s2 = inlined_call_operand.vmem [shape: f32[32,1], index: 2, kind: input, shape index: {}]
  %s3 = inlined_call_operand.hbm [shape: bf16[32,160], index: 3, kind: input, shape index: {}]
  %s4 = inlined_call_operand.vmem [shape: f32[32,1], index: 4, kind: input, shape index: {}]
  %s5 = inlined_call_operand.hbm [shape: f32[32,128], index: 5, kind: output, shape index: {}]
  %s6 = sld [smem:[#allocation0]]
  $region34: #{tpu_custom_call.1} parent=0
    _
  %s8 = ssub.s32 1, %s6
  %s9 = scalar_select 0, %s8, %s6
  $region1: #{tpu_custom_call.1} parent=0
    #allocation2 [shape = 'u8[16384]{0}', space=vmem, size = 0x4000, scoped, tag = 'input window, operand 3, single buffered']
    #allocation3 [shape = 's32[1]{0}', space=sflag, size = 0x4, scoped, tag = 'scoped memory for tpu_custom_call.1']
    #allocation4 [shape = 's32[1]{0}', space=sflag, size = 0x4, scoped, tag = 'scoped memory for tpu_custom_call.1']
    #allocation5 [shape = 'u8[16384]{0}', space=vmem, size = 0x4000, scoped, tag = 'output window, operand 0, single buffered']
    %10 = vsyncpa [#allocation3], 0
    %11 = vsyncpa [#allocation4], 0
    // Predicated region
    $region2: #{tpu_custom_call.1} parent=1 // pred_check
      _
    $region3: #{tpu_custom_call.1} parent=1 // pred_check_branch
      %13 = sbr.rel (0) target = $region5
    $region4: #{tpu_custom_call.1} parent=1 // pred_region
      _
    $region5: #{tpu_custom_call.1} parent=1 // pred_fallthru
      _
    // Predicated region
    $region6: #{tpu_custom_call.1} parent=1 // pred_check
      _
    $region7: #{tpu_custom_call.1} parent=1 // pred_check_branch
      %15 = sbr.rel (0) target = $region9
    $region8: #{tpu_custom_call.1} parent=1 // pred_region
      _
    $region9: #{tpu_custom_call.1} parent=1 // pred_fallthru
      _
    // Predicated region
    $region10: #{tpu_custom_call.1} parent=1 // pred_check
      _
    $region11: #{tpu_custom_call.1} parent=1 // pred_check_branch
      %17 = sbr.rel (0) target = $region13
    $region12: #{tpu_custom_call.1} parent=1 // pred_region
      _
    $region13: #{tpu_custom_call.1} parent=1 // pred_fallthru
      _
    // Predicated region
    $region14: #{tpu_custom_call.1} parent=1 // pred_check
      _
    $region15: #{tpu_custom_call.1} parent=1 // pred_check_branch
      %19 = sbr.rel (0) target = $region17
    $region16: #{tpu_custom_call.1} parent=1 // pred_region
      %s21 = ssub.s32 512, 512
      %22 = vsyncadd [#allocation3], %s21
      %s23 = sshll.u32 [#allocation2], 4
      %s24 = int_to_ptr.vmem [resolvable:$true] %s23
      %29 = dma.hbm_to_vmem [thread:$0]  %s3, 512, %s24, [#allocation3], 128, 128, 8
    $region17: #{tpu_custom_call.1} parent=1 // pred_fallthru
      _
    // Predicated region
    $region18: #{tpu_custom_call.1} parent=1 // pred_check
      _
    $region19: #{tpu_custom_call.1} parent=1 // pred_check_branch
      %31 = sbr.rel (0) target = $region21
    $region20: #{tpu_custom_call.1} parent=1 // pred_region
      _
    $region21: #{tpu_custom_call.1} parent=1 // pred_fallthru
      _
    // Predicated region
    $region22: #{tpu_custom_call.1} parent=1 // pred_check
      _
    $region23: #{tpu_custom_call.1} parent=1 // pred_check_branch
      %33 = sbr.rel (0) target = $region25
    $region24: #{tpu_custom_call.1} parent=1 // pred_region
      %34 = dma.done [#allocation3], 512
    $region25: #{tpu_custom_call.1} parent=1 // pred_fallthru
      _
    %v36 = vld [vmem:[%s0] sm:$0xff]
    %v37 = vld [vmem:[%s0 + $0x8] sm:$0xff]
    %v38 = vld [vmem:[%s0 + $0x10] sm:$0xff]
    %v39 = vld [vmem:[%s0 + $0x18] sm:$0xff]
    %v40 = vlaneseq
    %v41 = vand.u32 %v40, 127
    %vm42 = vcmp.lt.s32.totalorder %v41, 0
    %v43 = vsub.s32 0, %v41
    %v44 = vsel %vm42, %v43, %v41
    %v45 = vshrl.u32 %v44, 6
    %v46 = vand.u32 %v44, 63
    %v47 = vsub.s32 0, %v46
    %v48 = vsel %vm42, %v47, %v46
    %vm49 = vcmp.ne.s32.totalorder %v48, 0
    %vm50 = vcmp.lt.s32.totalorder %v48, 0
    %vm51 = vmand %vm50, %vm49
    %v52 = vadd.s32 %v48, 64
    %v53 = vsel %vm51, %v52, %v48
    %54 = vrot.lane.b32.xlu0 %v36, 2
    %v55 = vpop.permute.xlu0 %54
    %56 = vrot.lane.b32.xlu0 %v37, 2
    %v57 = vpop.permute.xlu0 %56
    %58 = vrot.lane.b32.xlu0 %v38, 2
    %v59 = vpop.permute.xlu0 %58
    %60 = vrot.lane.b32.xlu0 %v39, 2
    %v61 = vpop.permute.xlu0 %60
    %v62 = vadd.s32 %v53, 4294967294
    %vm63 = vcmp.ge.s32.totalorder %v62, 0
    %vm64 = vcmp.lt.s32.totalorder %v62, 64
    %vm65 = vmand %vm63, %vm64
    %v66 = vsel %vm65, %v55, 0.0
    %v67 = vsel %vm65, %v57, 0.0
    %v68 = vsel %vm65, %v59, 0.0
    %v69 = vsel %vm65, %v61, 0.0
    %70 = vrot.lane.b32.xlu0 %v36, 1
    %v71 = vpop.permute.xlu0 %70
    %72 = vrot.lane.b32.xlu0 %v37, 1
    %v73 = vpop.permute.xlu0 %72
    %74 = vrot.lane.b32.xlu0 %v38, 1
    %v75 = vpop.permute.xlu0 %74
    %76 = vrot.lane.b32.xlu0 %v39, 1
    %v77 = vpop.permute.xlu0 %76
    %v78 = vadd.s32 %v53, 4294967295
    %vm79 = vcmp.ge.s32.totalorder %v78, 0
    %vm80 = vcmp.lt.s32.totalorder %v78, 64
    %vm81 = vmand %vm79, %vm80
    %v82 = vsel %vm81, %v71, 0.0
    %v83 = vsel %vm81, %v73, 0.0
    %v84 = vsel %vm81, %v75, 0.0
    %v85 = vsel %vm81, %v77, 0.0
    %86 = vrot.lane.b32.xlu0 %v36, 127
    %v87 = vpop.permute.xlu0 %86
    %88 = vrot.lane.b32.xlu0 %v37, 127
    %v89 = vpop.permute.xlu0 %88
    %90 = vrot.lane.b32.xlu0 %v38, 127
    %v91 = vpop.permute.xlu0 %90
    %92 = vrot.lane.b32.xlu0 %v39, 127
    %v93 = vpop.permute.xlu0 %92
    %v94 = vadd.s32 %v53, 1
    %vm95 = vcmp.ge.s32.totalorder %v94, 0
    %vm96 = vcmp.lt.s32.totalorder %v94, 64
    %vm97 = vmand %vm95, %vm96
    %v98 = vsel %vm97, %v87, 0.0
    %v99 = vsel %vm97, %v89, 0.0
    %v100 = vsel %vm97, %v91, 0.0
    %v101 = vsel %vm97, %v93, 0.0
    %102 = vrot.lane.b32.xlu0 %v36, 126
    %v103 = vpop.permute.xlu0 %102
    %104 = vrot.lane.b32.xlu0 %v37, 126
    %v105 = vpop.permute.xlu0 %104
    %106 = vrot.lane.b32.xlu0 %v38, 126
    %v107 = vpop.permute.xlu0 %106
    %108 = vrot.lane.b32.xlu0 %v39, 126
    %v109 = vpop.permute.xlu0 %108
    %v110 = vadd.s32 %v53, 2
    %vm111 = vcmp.ge.s32.totalorder %v110, 0
    %vm112 = vcmp.lt.s32.totalorder %v110, 64
    %vm113 = vmand %vm111, %vm112
    %v114 = vsel %vm113, %v103, 0.0
    %v115 = vsel %vm113, %v105, 0.0
    %v116 = vsel %vm113, %v107, 0.0
    %v117 = vsel %vm113, %v109, 0.0
    %v118 = vld [vmem:[%s1] sm:$0xff]
    %v119 = vld [vmem:[%s1 + $0x8] sm:$0xff]
    %v120 = vld [vmem:[%s1 + $0x10] sm:$0xff]
    %v121 = vld [vmem:[%s1 + $0x18] sm:$0xff]
    %v122 = vpack.c.bf16 %v67, %v66
    %v123 = vpack.c.bf16 %v69, %v68
    %v124 = vpack.c.bf16 %v83, %v82
    %v125 = vpack.c.bf16 %v85, %v84
    %v126 = vpack.c.bf16 %v37, %v36
    %v127 = vpack.c.bf16 %v39, %v38
    %v128 = vpack.c.bf16 %v99, %v98
    %v129 = vpack.c.bf16 %v101, %v100
    %v130 = vpack.c.bf16 %v115, %v114
    %v131 = vpack.c.bf16 %v117, %v116
    %v132 = vld [vmem:[%s2] sm:$0xff]
    %v133 = vld [vmem:[%s2 + $0x8] sm:$0xff]
    %v134 = vld [vmem:[%s2 + $0x10] sm:$0xff]
    %v135 = vld [vmem:[%s2 + $0x18] sm:$0xff]
    %137 = vset.pattern.permute.xlu0 0
    %138 = vperm.xlu0 %137, %v132
    %v139 = vpop.permute.xlu0 %138
    %142 = vset.pattern.permute.xlu0 0
    %143 = vperm.xlu0 %142, %v133
    %v144 = vpop.permute.xlu0 %143
    %147 = vset.pattern.permute.xlu0 0
    %148 = vperm.xlu0 %147, %v134
    %v149 = vpop.permute.xlu0 %148
    %152 = vset.pattern.permute.xlu0 0
    %153 = vperm.xlu0 %152, %v135
    %v154 = vpop.permute.xlu0 %153
    %v160 = vunpack.c.l.b16 %v118
    %v161 = vunpack.c.h.b16 %v118
    %v162 = vunpack.c.l.b16 %v119
    %v163 = vunpack.c.h.b16 %v119
    %v164 = vunpack.c.l.b16 %v120
    %v165 = vunpack.c.h.b16 %v120
    %v166 = vunpack.c.l.b16 %v121
    %v167 = vunpack.c.h.b16 %v121
    %v168 = vpack.c.b16 %v162, %v160
    %v169 = vpack.c.b16 %v163, %v161
    %v170 = vpack.c.b16 %v166, %v164
    %v171 = vpack.c.b16 %v167, %v165
    %vm174 = vcmask 261120
    %v176 = vsel %vm174, %v169, 0
    %v179 = vsel %vm174, %v171, 0
    %181 = vmatprep.subr.bf16.mxu0 0
    %182 = vmatpush1.bf16.msra.mxu0 %v129
    %183 = vmatprep.subr.bf16.mxu0 0
    %184 = vmatpush1.bf16.msra.mxu0 %v128
    %185 = vmatprep.subr.bf16.mxu0 0
    %186 = vmatpush1.bf16.msra.mxu0 %v127
    %187 = vmatprep.subr.bf16.mxu0 0
    %188 = vmatpush1.bf16.msra.mxu0 %v126
    %189 = vmatprep.subr.bf16.mxu0 0
    %190 = vmatpush1.bf16.msra.mxu0 %v125
    %191 = vmatprep.subr.bf16.mxu0 0
    %192 = vmatpush1.bf16.msra.mxu0 %v124
    %193 = vmatprep.subr.bf16.mxu0 0
    %194 = vmatpush1.bf16.msra.mxu0 %v123
    %195 = vmatprep.subr.bf16.mxu0 0
    %196 = vmatpush1.bf16.msra.mxu0 %v122
    %197 = vmatprep.subr.bf16.mxu0 0
    %198 = vmatpush2.bf16.msra.mxu0 0
    %199 = vmatprep.subr.bf16.mxu0 0
    %200 = vmatpush2.bf16.msra.mxu0 0
    %201 = vmatprep.subr.bf16.mxu0 0
    %202 = vmatpush2.bf16.msra.mxu0 0
    %203 = vmatprep.subr.bf16.mxu0 0
    %204 = vmatpush2.bf16.msra.mxu0 0
    %205 = vmatprep.subr.bf16.mxu0 0
    %206 = vmatpush2.bf16.msra.mxu0 0
    %207 = vmatprep.subr.bf16.mxu0 0
    %208 = vmatpush2.bf16.msra.mxu0 0
    %209 = vmatprep.subr.bf16.mxu0 0
    %210 = vmatpush2.bf16.msra.mxu0 %v131
    %211 = vmatprep.subr.bf16.mxu0 0
    %212 = vmatpush2.bf16.msra.mxu0 %v130
    %213 = vmatprep.mubr.bf16.mxu0 %v176
    %214 = vmatmul.mubr.bf16.gmra.mxu0 %v168
    %v215 = vpop.f32.mrf.mxu0
    %v216 = vadd.f32 %v139, %v215
    %v217 = vpop.f32.mrf.mxu0
    %v218 = vpop.f32.mrf.mxu0
    %v219 = vadd.f32 %v144, %v218
    %v220 = vpop.f32.mrf.mxu0
    %221 = vmatprep.mubr.bf16.mxu0 %v179
    %222 = vmatmul.mubr.bf16.gmra.mxu0 %v170
    %v223 = vpop.f32.mrf.mxu0
    %v224 = vadd.f32 %v149, %v223
    %v225 = vpop.f32.mrf.mxu0
    %v226 = vpop.f32.mrf.mxu0
    %v227 = vadd.f32 %v154, %v226
    %v228 = vpop.f32.mrf.mxu0
    %229 = vdwg.mxu0
    %v230 = vmax.f32 %v216, 0.0
    %v231 = vmax.f32 %v219, 0.0
    %v232 = vmax.f32 %v224, 0.0
    %v233 = vmax.f32 %v227, 0.0
    %234 = vrot.lane.b32.xlu0 %v230, 2
    %v235 = vpop.permute.xlu0 %234
    %236 = vrot.lane.b32.xlu0 %v231, 2
    %v237 = vpop.permute.xlu0 %236
    %238 = vrot.lane.b32.xlu0 %v232, 2
    %v239 = vpop.permute.xlu0 %238
    %240 = vrot.lane.b32.xlu0 %v233, 2
    %v241 = vpop.permute.xlu0 %240
    %v242 = vsel %vm65, %v235, 0.0
    %v243 = vsel %vm65, %v237, 0.0
    %v244 = vsel %vm65, %v239, 0.0
    %v245 = vsel %vm65, %v241, 0.0
    %246 = vrot.lane.b32.xlu0 %v230, 1
    %v247 = vpop.permute.xlu0 %246
    %248 = vrot.lane.b32.xlu0 %v231, 1
    %v249 = vpop.permute.xlu0 %248
    %250 = vrot.lane.b32.xlu0 %v232, 1
    %v251 = vpop.permute.xlu0 %250
    %252 = vrot.lane.b32.xlu0 %v233, 1
    %v253 = vpop.permute.xlu0 %252
    %v254 = vsel %vm81, %v247, 0.0
    %v255 = vsel %vm81, %v249, 0.0
    %v256 = vsel %vm81, %v251, 0.0
    %v257 = vsel %vm81, %v253, 0.0
    %258 = vrot.lane.b32.xlu0 %v230, 127
    %v259 = vpop.permute.xlu0 %258
    %260 = vrot.lane.b32.xlu0 %v231, 127
    %v261 = vpop.permute.xlu0 %260
    %262 = vrot.lane.b32.xlu0 %v232, 127
    %v263 = vpop.permute.xlu0 %262
    %264 = vrot.lane.b32.xlu0 %v233, 127
    %v265 = vpop.permute.xlu0 %264
    %v266 = vsel %vm97, %v259, 0.0
    %v267 = vsel %vm97, %v261, 0.0
    %v268 = vsel %vm97, %v263, 0.0
    %v269 = vsel %vm97, %v265, 0.0
    %270 = vrot.lane.b32.xlu0 %v230, 126
    %v271 = vpop.permute.xlu0 %270
    %272 = vrot.lane.b32.xlu0 %v231, 126
    %v273 = vpop.permute.xlu0 %272
    %274 = vrot.lane.b32.xlu0 %v232, 126
    %v275 = vpop.permute.xlu0 %274
    %276 = vrot.lane.b32.xlu0 %v233, 126
    %v277 = vpop.permute.xlu0 %276
    %v278 = vsel %vm113, %v271, 0.0
    %v279 = vsel %vm113, %v273, 0.0
    %v280 = vsel %vm113, %v275, 0.0
    %v281 = vsel %vm113, %v277, 0.0
    %v282 = vld [vmem:[#allocation2] sm:$0xff]
    %v283 = vld [vmem:[#allocation2 + $0x8] sm:$0xff]
    %v284 = vld [vmem:[#allocation2 + $0x10] sm:$0xff]
    %v285 = vld [vmem:[#allocation2 + $0x18] sm:$0xff]
    %v286 = vpack.c.bf16 %v243, %v242
    %v287 = vpack.c.bf16 %v245, %v244
    %v288 = vpack.c.bf16 %v255, %v254
    %v289 = vpack.c.bf16 %v257, %v256
    %v290 = vpack.c.bf16 %v231, %v230
    %v291 = vpack.c.bf16 %v233, %v232
    %v292 = vpack.c.bf16 %v267, %v266
    %v293 = vpack.c.bf16 %v269, %v268
    %v294 = vpack.c.bf16 %v279, %v278
    %v295 = vpack.c.bf16 %v281, %v280
    %v296 = vld [vmem:[%s4] sm:$0xff]
    %v297 = vld [vmem:[%s4 + $0x8] sm:$0xff]
    %v298 = vld [vmem:[%s4 + $0x10] sm:$0xff]
    %v299 = vld [vmem:[%s4 + $0x18] sm:$0xff]
    %301 = vset.pattern.permute.xlu0 0
    %302 = vperm.xlu0 %301, %v296
    %v303 = vpop.permute.xlu0 %302
    %306 = vset.pattern.permute.xlu0 0
    %307 = vperm.xlu0 %306, %v297
    %v308 = vpop.permute.xlu0 %307
    %311 = vset.pattern.permute.xlu0 0
    %312 = vperm.xlu0 %311, %v298
    %v313 = vpop.permute.xlu0 %312
    %316 = vset.pattern.permute.xlu0 0
    %317 = vperm.xlu0 %316, %v299
    %v318 = vpop.permute.xlu0 %317
    %v324 = vunpack.c.l.b16 %v282
    %v325 = vunpack.c.h.b16 %v282
    %v326 = vunpack.c.l.b16 %v283
    %v327 = vunpack.c.h.b16 %v283
    %v328 = vunpack.c.l.b16 %v284
    %v329 = vunpack.c.h.b16 %v284
    %v330 = vunpack.c.l.b16 %v285
    %v331 = vunpack.c.h.b16 %v285
    %v332 = vpack.c.b16 %v326, %v324
    %v333 = vpack.c.b16 %v327, %v325
    %v334 = vpack.c.b16 %v330, %v328
    %v335 = vpack.c.b16 %v331, %v329
    %v339 = vsel %vm174, %v333, 0
    %v342 = vsel %vm174, %v335, 0
    %344 = vmatprep.subr.bf16.mxu0 0
    %345 = vmatpush1.bf16.msra.mxu0 %v293
    %346 = vmatprep.subr.bf16.mxu0 0
    %347 = vmatpush1.bf16.msra.mxu0 %v292
    %348 = vmatprep.subr.bf16.mxu0 0
    %349 = vmatpush1.bf16.msra.mxu0 %v291
    %350 = vmatprep.subr.bf16.mxu0 0
    %351 = vmatpush1.bf16.msra.mxu0 %v290
    %352 = vmatprep.subr.bf16.mxu0 0
    %353 = vmatpush1.bf16.msra.mxu0 %v289
    %354 = vmatprep.subr.bf16.mxu0 0
    %355 = vmatpush1.bf16.msra.mxu0 %v288
    %356 = vmatprep.subr.bf16.mxu0 0
    %357 = vmatpush1.bf16.msra.mxu0 %v287
    %358 = vmatprep.subr.bf16.mxu0 0
    %359 = vmatpush1.bf16.msra.mxu0 %v286
    %360 = vmatprep.subr.bf16.mxu0 0
    %361 = vmatpush2.bf16.msra.mxu0 0
    %362 = vmatprep.subr.bf16.mxu0 0
    %363 = vmatpush2.bf16.msra.mxu0 0
    %364 = vmatprep.subr.bf16.mxu0 0
    %365 = vmatpush2.bf16.msra.mxu0 0
    %366 = vmatprep.subr.bf16.mxu0 0
    %367 = vmatpush2.bf16.msra.mxu0 0
    %368 = vmatprep.subr.bf16.mxu0 0
    %369 = vmatpush2.bf16.msra.mxu0 0
    %370 = vmatprep.subr.bf16.mxu0 0
    %371 = vmatpush2.bf16.msra.mxu0 0
    %372 = vmatprep.subr.bf16.mxu0 0
    %373 = vmatpush2.bf16.msra.mxu0 %v295
    %374 = vmatprep.subr.bf16.mxu0 0
    %375 = vmatpush2.bf16.msra.mxu0 %v294
    %376 = vmatprep.mubr.bf16.mxu0 %v339
    %377 = vmatmul.mubr.bf16.gmra.mxu0 %v332
    %v378 = vpop.f32.mrf.mxu0
    %v379 = vadd.f32 %v303, %v378
    %v380 = vpop.f32.mrf.mxu0
    %v381 = vpop.f32.mrf.mxu0
    %v382 = vadd.f32 %v308, %v381
    %v383 = vpop.f32.mrf.mxu0
    %384 = vmatprep.mubr.bf16.mxu0 %v342
    %385 = vmatmul.mubr.bf16.gmra.mxu0 %v334
    %v386 = vpop.f32.mrf.mxu0
    %v387 = vadd.f32 %v313, %v386
    %v388 = vpop.f32.mrf.mxu0
    %v389 = vpop.f32.mrf.mxu0
    %v390 = vadd.f32 %v318, %v389
    %v391 = vpop.f32.mrf.mxu0
    %392 = vdwg.mxu0
    %v393 = vadd.f32 %v379, %v36
    %v394 = vadd.f32 %v382, %v37
    %v395 = vadd.f32 %v387, %v38
    %v396 = vadd.f32 %v390, %v39
    %v397 = vmax.f32 %v393, 0.0
    %v398 = vmax.f32 %v394, 0.0
    %v399 = vmax.f32 %v395, 0.0
    %v400 = vmax.f32 %v396, 0.0
    %401 = vst [vmem:[#allocation5] sm:$0xff] %v397
    %402 = vst [vmem:[#allocation5 + $0x8] sm:$0xff] %v398
    %403 = vst [vmem:[#allocation5 + $0x10] sm:$0xff] %v399
    %404 = vst [vmem:[#allocation5 + $0x18] sm:$0xff] %v400
    // Predicated region
    $region26: #{tpu_custom_call.1} parent=1 // pred_check
      _
    $region27: #{tpu_custom_call.1} parent=1 // pred_check_branch
      %406 = sbr.rel (0) target = $region29
    $region28: #{tpu_custom_call.1} parent=1 // pred_region
      %s408 = ssub.s32 512, 512
      %409 = vsyncadd [#allocation4], %s408
      %s410 = sshll.u32 [#allocation5], 4
      %s411 = int_to_ptr.vmem [resolvable:$true] %s410
      %416 = dma.vmem_to_hbm [thread:$0]  %s411, 512, %s5, [#allocation4], 128, 128, 8
    $region29: #{tpu_custom_call.1} parent=1 // pred_fallthru
      _
    // Predicated region
    $region30: #{tpu_custom_call.1} parent=1 // pred_check
      _
    $region31: #{tpu_custom_call.1} parent=1 // pred_check_branch
      %418 = sbr.rel (0) target = $region33
    $region32: #{tpu_custom_call.1} parent=1 // pred_region
      %419 = dma.done [#allocation4], 512
    $region33: #{tpu_custom_call.1} parent=1 // pred_fallthru
      _
    %420 = vsyncpa [#allocation3], 1
    %421 = vsyncpa [#allocation4], 1

</llo_original>
